<compile_context>
chip_gen: v5e
topology: v5e:2x2
jax: 0.10.0
libtpu: 0.0.40
codegen_flags: <defaults>
</compile_context>

<pallas_src>
import functools

import jax
import jax.numpy as jnp
from jax.experimental import pallas as pl
from jax.experimental.pallas import tpu as pltpu


def _round_up(x, m):
    return ((x + m - 1) // m) * m


# ---------------------------------------------------------------------------
# Kernels
# ---------------------------------------------------------------------------

def _feature_transform_kernel(x_ref, w_ref, o_ref):
    # o = x @ w   (bf16 operands, f32 MXU accumulation)
    o_ref[...] = jnp.dot(x_ref[...], w_ref[...],
                         preferred_element_type=jnp.float32)


def feature_transform(x_bf16, w_bf16, *, tm=128):
    """Row-tiled dense X @ W. x: [N, F_in] bf16, w: [F_in, F_out] bf16 -> f32."""
    n, f_in = x_bf16.shape
    f_out = w_bf16.shape[1]
    return pl.pallas_call(
        _feature_transform_kernel,
        out_shape=jax.ShapeDtypeStruct((n, f_out), jnp.float32),
        grid_spec=pltpu.PrefetchScalarGridSpec(
            num_scalar_prefetch=0,
            grid=(n // tm,),
            in_specs=[
                pl.BlockSpec((tm, f_in), lambda i: (i, 0)),
                pl.BlockSpec((f_in, f_out), lambda i: (0, 0)),
            ],
            out_specs=pl.BlockSpec((tm, f_out), lambda i: (i, 0)),
        ),
        compiler_params=pltpu.CompilerParams(
            dimension_semantics=("parallel",),
            vmem_limit_bytes=32 * 1024 * 1024,
        ),
    )(x_bf16, w_bf16)


def _aggregate_kernel(a_ref, z_ref, b_ref, o_ref, acc_ref, *, apply_relu):
    # out[i_tile, :] = sum_k A[i_tile, k_tile] @ Z[k_tile, :]  (+ bias, optional relu)
    k = pl.program_id(1)

    @pl.when(k == 0)
    def _():
        acc_ref[...] = jnp.zeros_like(acc_ref)

    acc_ref[...] += jnp.dot(a_ref[...], z_ref[...],
                            preferred_element_type=jnp.float32)

    @pl.when(k == pl.num_programs(1) - 1)
    def _():
        out = acc_ref[...] + b_ref[...]
        if apply_relu:
            out = jnp.maximum(out, 0.0)
        o_ref[...] = out


def aggregate(a_bf16, z_bf16, bias_f32, *, apply_relu, tm=128, tk=128):
    """Tiled A_norm @ Z + b. a: [N, N] bf16, z: [N, C] bf16, bias: [1, C] f32 -> f32.

    Tile-size notes: tm/tk = 128 is sized for the toy demo below; at realistic N
    sweep toward 256-512 (halve the per-tile footprint on v7x, which has 64 MiB
    VMEM per TensorCore vs 128 MiB on v5e/v6e).
    """
    n = a_bf16.shape[0]
    c = z_bf16.shape[1]
    kernel = functools.partial(_aggregate_kernel, apply_relu=apply_relu)
    return pl.pallas_call(
        kernel,
        out_shape=jax.ShapeDtypeStruct((n, c), jnp.float32),
        grid_spec=pltpu.PrefetchScalarGridSpec(
            num_scalar_prefetch=0,
            grid=(n // tm, n // tk),
            in_specs=[
                pl.BlockSpec((tm, tk), lambda i, k: (i, k)),   # A tile (streamed)
                pl.BlockSpec((tk, c), lambda i, k: (k, 0)),    # Z tile
                pl.BlockSpec((1, c), lambda i, k: (0, 0)),     # bias (resident)
            ],
            out_specs=pl.BlockSpec((tm, c), lambda i, k: (i, 0)),
            scratch_shapes=[pltpu.VMEM((tm, c), jnp.float32)],
        ),
        compiler_params=pltpu.CompilerParams(
            # dst-row tiles shard across TensorCores (v7x megacore); the
            # src-reduction axis carries the accumulator -> arbitrary.
            dimension_semantics=("parallel", "arbitrary"),
            vmem_limit_bytes=32 * 1024 * 1024,
        ),
    )(a_bf16, z_bf16, bias_f32)


# ---------------------------------------------------------------------------
# GCN encoder wrapper
# ---------------------------------------------------------------------------

def gcn_encoder(a_norm, x, w1, b1, w2, b2, *, tm=128, tk=128):
    """out = A_norm @ (relu(A_norm @ (x @ w1) + b1) @ w2) + b2 (sliced to real shape)."""
    n, f_in = x.shape
    hidden = w1.shape[1]
    out_channels = w2.shape[1]

    # Pad node dim to the tile size, feature/output dims to 128 lanes.
    n_pad = _round_up(n, max(tm, tk))
    h_pad = _round_up(hidden, 128)
    c_pad = _round_up(out_channels, 128)

    bf16 = jnp.bfloat16
    a_b = jnp.zeros((n_pad, n_pad), bf16).at[:n, :n].set(a_norm.astype(bf16))
    x_b = jnp.zeros((n_pad, f_in), bf16).at[:n, :].set(x.astype(bf16))
    w1_b = jnp.zeros((f_in, h_pad), bf16).at[:, :hidden].set(w1.astype(bf16))
    b1_p = jnp.zeros((1, h_pad), jnp.float32).at[:, :hidden].set(b1.reshape(1, -1))
    w2_b = jnp.zeros((h_pad, c_pad), bf16).at[:hidden, :out_channels].set(w2.astype(bf16))
    b2_p = jnp.zeros((1, c_pad), jnp.float32).at[:, :out_channels].set(b2.reshape(1, -1))

    # Layer 1: H = relu(A @ (X W1) + b1)
    z1 = feature_transform(x_b, w1_b, tm=tm)                                  # [n_pad, h_pad] f32
    h = aggregate(a_b, z1.astype(bf16), b1_p, apply_relu=True, tm=tm, tk=tk)  # [n_pad, h_pad] f32
    # Layer 2: O = A @ (H W2) + b2
    z2 = feature_transform(h.astype(bf16), w2_b, tm=tm)                       # [n_pad, c_pad] f32
    out = aggregate(a_b, z2.astype(bf16), b2_p, apply_relu=False, tm=tm, tk=tk)

    return out[:n, :out_channels]


# ---------------------------------------------------------------------------
# Graph glue (plain JAX) + init helpers
# ---------------------------------------------------------------------------

def build_normalized_adjacency(edge_index, num_nodes):
    src = edge_index[0]
    dst = edge_index[1]
    a = jnp.zeros((num_nodes, num_nodes), jnp.float32).at[dst, src].add(1.0)
    # PyG gcn_norm uses add_remaining_self_loops: only add a unit self loop to
    # nodes that do not already have one.
    diag = jnp.diagonal(a)
    a = a + jnp.diag(jnp.where(diag == 0, 1.0, 0.0))
    deg = a.sum(axis=1)
    dinv = jnp.where(deg > 0, 1.0 / jnp.sqrt(deg), 0.0)
    return dinv[:, None] * a * dinv[None, :]


def glorot(key, shape):
    fan_in, fan_out = shape
    limit = jnp.sqrt(6.0 / (fan_in + fan_out))
    return jax.random.uniform(key, shape, jnp.float32, -limit, limit)


def reference_forward(a_norm, x, w1, b1, w2, b2):
    # Pure-JAX reference with the same bf16-operand / f32-accumulate arithmetic.
    bf16 = jnp.bfloat16
    ab = a_norm.astype(bf16)
    z1 = jnp.dot(x.astype(bf16), w1.astype(bf16), preferred_element_type=jnp.float32)
    h = jnp.maximum(jnp.dot(ab, z1.astype(bf16), preferred_element_type=jnp.float32) + b1, 0.0)
    z2 = jnp.dot(h.astype(bf16), w2.astype(bf16), preferred_element_type=jnp.float32)
    return jnp.dot(ab, z2.astype(bf16), preferred_element_type=jnp.float32) + b2


if __name__ == "__main__":
    key = jax.random.PRNGKey(0)

    # Small shapes consistent with the module:
    #   num_features (in_channels) = 16, out_channels = 64, hidden = 2*64 = 128
    num_nodes = 8
    in_channels = 16
    out_channels = 64
    hidden = 2 * out_channels

    k_x, k_w1, k_b1, k_w2, k_b2 = jax.random.split(key, 5)

    x = jax.random.normal(k_x, (num_nodes, in_channels), jnp.float32)

    # Deterministic synthetic directed edge list (2, E) among 8 nodes.
    edge_index = jnp.array(
        [[0, 1, 1, 2, 2, 3, 3, 4, 4, 5, 5, 6, 6, 7, 7, 0],
         [1, 0, 2, 1, 3, 2, 4, 3, 5, 4, 6, 5, 7, 6, 0, 7]],
        dtype=jnp.int32)

    # Deterministic synthetic parameters (glorot weights, small random biases
    # so the bias path is exercised).
    w1 = glorot(k_w1, (in_channels, hidden))
    b1 = 0.1 * jax.random.normal(k_b1, (1, hidden), jnp.float32)
    w2 = glorot(k_w2, (hidden, out_channels))
    b2 = 0.1 * jax.random.normal(k_b2, (1, out_channels), jnp.float32)

    a_norm = build_normalized_adjacency(edge_index, num_nodes)

    out = gcn_encoder(a_norm, x, w1, b1, w2, b2)
    out = jax.block_until_ready(out)

    out_ref = reference_forward(a_norm, x, w1, b1, w2, b2)
    out_f32 = jnp.maximum(a_norm @ (x @ w1) + b1, 0.0)
    out_f32 = a_norm @ (out_f32 @ w2) + b2

    assert out.shape == (num_nodes, out_channels)
    assert jnp.allclose(out, out_ref, atol=1e-3, rtol=1e-3)       # matches bf16 arithmetic
    assert jnp.allclose(out, out_f32, atol=5e-2, rtol=5e-2)       # loose check vs f32 math

    print("KERNEL_OK")
</pallas_src>

<mosaic_0001>
module attributes {stable_mosaic.version = 11 : i64} {
  func.func @_feature_transform_kernel(%arg0: i32, %arg1: memref<128x16xbf16, #tpu.memory_space<vmem>>, %arg2: memref<16x128xbf16, #tpu.memory_space<vmem>>, %arg3: memref<128x128xf32, #tpu.memory_space<vmem>>) attributes {dimension_semantics = [#tpu.dimension_semantics<parallel>], iteration_bounds = array<i64: 1>, scalar_prefetch = 0 : i64, scratch_operands = 0 : i64, tpu.core_type = #tpu.core_type<tc>, window_params = [{transform_indices = @transform_0, window_bounds = array<i64: 128, 16>}, {pipeline_mode = #tpu.pipeline_mode<synchronous>, transform_indices = @transform_1, window_bounds = array<i64: 16, 128>}, {transform_indices = @transform_2, window_bounds = array<i64: 128, 128>}]} {
    %c0 = arith.constant 0 : index
    %c0_0 = arith.constant 0 : index
    %0 = vector.load %arg1[%c0, %c0_0] : memref<128x16xbf16, #tpu.memory_space<vmem>>, vector<128x16xbf16>
    %c0_1 = arith.constant 0 : index
    %c0_2 = arith.constant 0 : index
    %1 = vector.load %arg2[%c0_1, %c0_2] : memref<16x128xbf16, #tpu.memory_space<vmem>>, vector<16x128xbf16>
    %cst = arith.constant dense<0.000000e+00> : vector<128x128xf32>
    %2 = tpu.matmul %0, %1, %cst {dimension_numbers = #tpu.dot_dimension_numbers<[1], [0], [0], [1], [0, 0, 1, 1], [], []>} : vector<128x16xbf16>, vector<16x128xbf16>, vector<128x128xf32> -> vector<128x128xf32>
    %c0_3 = arith.constant 0 : index
    %c0_4 = arith.constant 0 : index
    %3 = vector.load %arg3[%c0_3, %c0_4] : memref<128x128xf32, #tpu.memory_space<vmem>>, vector<128x128xf32>
    tpu.vector_store %arg3[%c0_3, %c0_4], %2 {strides = array<i32>} : memref<128x128xf32, #tpu.memory_space<vmem>>, vector<128x128xf32>,
    return
  }
  func.func @transform_0(%arg0: i32) -> (i32, i32) {
    %c0_i32 = arith.constant 0 : i32
    %c0_i32_0 = arith.constant 0 : i32
    return %arg0, %c0_i32 : i32, i32
  }
  func.func @transform_1(%arg0: i32) -> (i32, i32) {
    %c0_i32 = arith.constant 0 : i32
    %c0_i32_0 = arith.constant 0 : i32
    %c0_i32_1 = arith.constant 0 : i32
    return %c0_i32, %c0_i32_0 : i32, i32
  }
  func.func @transform_2(%arg0: i32) -> (i32, i32) {
    %c0_i32 = arith.constant 0 : i32
    %c0_i32_0 = arith.constant 0 : i32
    return %arg0, %c0_i32 : i32, i32
  }
}

</mosaic_0001>

<llo_original>
// kernel: tpu_custom_call.1
$region0: #{tpu_custom_call.1}
  #allocation0 [shape = 'u32[]', space=smem, size = 0x4, offset = 0x4, fixed_abs, tag = 'smem constant byte address 0x4 - core index']
  #allocation1 [shape = 'u32[72,128]{1,0:T(1,128)}', space=vmem, size = 0x9000, scoped, tag = 'internal scratch']
  %s0 = inlined_call_operand.vmem [shape: bf16[128,16], index: 0, kind: input, shape index: {}]
  %s1 = inlined_call_operand.vmem [shape: bf16[16,128], index: 1, kind: input, shape index: {}]
  %s2 = inlined_call_operand.hbm [shape: f32[128,128], index: 2, kind: output, shape index: {}]
  %s3 = sld [smem:[#allocation0]]
  $region18: #{tpu_custom_call.1} parent=0
    _
  %s5 = ssub.s32 1, %s3
  %s6 = scalar_select 0, %s5, %s3
  $region1: #{tpu_custom_call.1} parent=0
    #allocation2 [shape = 'u8[65536]{0}', space=vmem, size = 0x10000, scoped, tag = 'output window, operand 0, single buffered']
    #allocation3 [shape = 's32[1]{0}', space=sflag, size = 0x4, scoped, tag = 'scoped memory for tpu_custom_call.1']
    %7 = vsyncpa [#allocation3], 0
    // Predicated region
    $region2: #{tpu_custom_call.1} parent=1 // pred_check
      _
    $region3: #{tpu_custom_call.1} parent=1 // pred_check_branch
      %9 = sbr.rel (0) target = $region5
    $region4: #{tpu_custom_call.1} parent=1 // pred_region
      _
    $region5: #{tpu_custom_call.1} parent=1 // pred_fallthru
      _
    // Predicated region
    $region6: #{tpu_custom_call.1} parent=1 // pred_check
      _
    $region7: #{tpu_custom_call.1} parent=1 // pred_check_branch
      %11 = sbr.rel (0) target = $region9
    $region8: #{tpu_custom_call.1} parent=1 // pred_region
      _
    $region9: #{tpu_custom_call.1} parent=1 // pred_fallthru
      _
    %v13 = vld [vmem:[%s0] sm:$0xf]
    %v14 = vld [vmem:[%s0 + $0x4] sm:$0xf]
    %v15 = vld [vmem:[%s0 + $0x8] sm:$0xf]
    %v16 = vld [vmem:[%s0 + $0xc] sm:$0xf]
    %v17 = vld [vmem:[%s0 + $0x10] sm:$0xf]
    %v18 = vld [vmem:[%s0 + $0x14] sm:$0xf]
    %v19 = vld [vmem:[%s0 + $0x18] sm:$0xf]
    %v20 = vld [vmem:[%s0 + $0x1c] sm:$0xf]
    %v21 = vld [vmem:[%s0 + $0x20] sm:$0xf]
    %v22 = vld [vmem:[%s0 + $0x24] sm:$0xf]
    %v23 = vld [vmem:[%s0 + $0x28] sm:$0xf]
    %v24 = vld [vmem:[%s0 + $0x2c] sm:$0xf]
    %v25 = vld [vmem:[%s0 + $0x30] sm:$0xf]
    %v26 = vld [vmem:[%s0 + $0x34] sm:$0xf]
    %v27 = vld [vmem:[%s0 + $0x38] sm:$0xf]
    %v28 = vld [vmem:[%s0 + $0x3c] sm:$0xf]
    %v29 = vld [vmem:[%s1] sm:$0xf]
    %v30 = vld [vmem:[%s1 + $0x4] sm:$0xf]
    %v47 = vunpack.c.l.b16 %v13
    %v48 = vunpack.c.l.b16 %v14
    %v49 = vunpack.c.l.b16 %v15
    %v50 = vunpack.c.l.b16 %v16
    %v51 = vunpack.c.l.b16 %v17
    %v52 = vunpack.c.l.b16 %v18
    %v53 = vunpack.c.l.b16 %v19
    %v54 = vunpack.c.l.b16 %v20
    %v55 = vunpack.c.l.b16 %v21
    %v56 = vunpack.c.l.b16 %v22
    %v57 = vunpack.c.l.b16 %v23
    %v58 = vunpack.c.l.b16 %v24
    %v59 = vunpack.c.l.b16 %v25
    %v60 = vunpack.c.l.b16 %v26
    %v61 = vunpack.c.l.b16 %v27
    %v62 = vunpack.c.l.b16 %v28
    %v63 = vpack.c.b16 %v48, %v47
    %v64 = vpack.c.b16 %v50, %v49
    %v65 = vpack.c.b16 %v52, %v51
    %v66 = vpack.c.b16 %v54, %v53
    %v67 = vpack.c.b16 %v56, %v55
    %v68 = vpack.c.b16 %v58, %v57
    %v69 = vpack.c.b16 %v60, %v59
    %v70 = vpack.c.b16 %v62, %v61
    %v73 = vunpack.c.l.b16 %v29
    %v74 = vunpack.c.l.b16 %v30
    %v75 = vpack.c.b16 %v74, %v73
    %vm77 = vcmask 130048
    %v79 = vsel %vm77, %v63, 0
    %v82 = vsel %vm77, %v64, 0
    %v85 = vsel %vm77, %v65, 0
    %v88 = vsel %vm77, %v66, 0
    %v91 = vsel %vm77, %v67, 0
    %v94 = vsel %vm77, %v68, 0
    %v97 = vsel %vm77, %v69, 0
    %v100 = vsel %vm77, %v70, 0
    %102 = vmatpush.bf16.msra.mxu0 0
    %103 = vmatpush.bf16.msra.mxu0 0
    %104 = vmatpush.bf16.msra.mxu0 0
    %105 = vmatpush.bf16.msra.mxu0 0
    %106 = vmatpush.bf16.msra.mxu0 0
    %107 = vmatpush.bf16.msra.mxu0 0
    %108 = vmatpush.bf16.msra.mxu0 0
    %109 = vmatpush.bf16.msra.mxu0 %v75
    %110 = vmatmul.bf16.gmra.mxu0 %v79
    %v111 = vpop.f32.mrf.mxu0
    %v112 = vadd.f32 0.0, %v111
    %v113 = vpop.f32.mrf.mxu0
    %v114 = vadd.f32 0.0, %v113
    %115 = vmatmul.bf16.gmra.mxu0 %v82
    %v116 = vpop.f32.mrf.mxu0
    %v117 = vadd.f32 0.0, %v116
    %v118 = vpop.f32.mrf.mxu0
    %v119 = vadd.f32 0.0, %v118
    %120 = vmatmul.bf16.gmra.mxu0 %v85
    %v121 = vpop.f32.mrf.mxu0
    %v122 = vadd.f32 0.0, %v121
    %v123 = vpop.f32.mrf.mxu0
    %v124 = vadd.f32 0.0, %v123
    %125 = vmatmul.bf16.gmra.mxu0 %v88
    %v126 = vpop.f32.mrf.mxu0
    %v127 = vadd.f32 0.0, %v126
    %v128 = vpop.f32.mrf.mxu0
    %v129 = vadd.f32 0.0, %v128
    %130 = vmatmul.bf16.gmra.mxu0 %v91
    %v131 = vpop.f32.mrf.mxu0
    %v132 = vadd.f32 0.0, %v131
    %v133 = vpop.f32.mrf.mxu0
    %v134 = vadd.f32 0.0, %v133
    %135 = vmatmul.bf16.gmra.mxu0 %v94
    %v136 = vpop.f32.mrf.mxu0
    %v137 = vadd.f32 0.0, %v136
    %v138 = vpop.f32.mrf.mxu0
    %v139 = vadd.f32 0.0, %v138
    %140 = vmatmul.bf16.gmra.mxu0 %v97
    %v141 = vpop.f32.mrf.mxu0
    %v142 = vadd.f32 0.0, %v141
    %v143 = vpop.f32.mrf.mxu0
    %v144 = vadd.f32 0.0, %v143
    %145 = vmatmul.bf16.gmra.mxu0 %v100
    %v146 = vpop.f32.mrf.mxu0
    %v147 = vadd.f32 0.0, %v146
    %v148 = vpop.f32.mrf.mxu0
    %v149 = vadd.f32 0.0, %v148
    %150 = vdwg.mxu0
    %151 = vst [vmem:[#allocation2] sm:$0xff] %v112
    %152 = vst [vmem:[#allocation2 + $0x8] sm:$0xff] %v114
    %153 = vst [vmem:[#allocation2 + $0x10] sm:$0xff] %v117
    %154 = vst [vmem:[#allocation2 + $0x18] sm:$0xff] %v119
    %155 = vst [vmem:[#allocation2 + $0x20] sm:$0xff] %v122
    %156 = vst [vmem:[#allocation2 + $0x28] sm:$0xff] %v124
    %157 = vst [vmem:[#allocation2 + $0x30] sm:$0xff] %v127
    %158 = vst [vmem:[#allocation2 + $0x38] sm:$0xff] %v129
    %159 = vst [vmem:[#allocation2 + $0x40] sm:$0xff] %v132
    %160 = vst [vmem:[#allocation2 + $0x48] sm:$0xff] %v134
    %161 = vst [vmem:[#allocation2 + $0x50] sm:$0xff] %v137
    %162 = vst [vmem:[#allocation2 + $0x58] sm:$0xff] %v139
    %163 = vst [vmem:[#allocation2 + $0x60] sm:$0xff] %v142
    %164 = vst [vmem:[#allocation2 + $0x68] sm:$0xff] %v144
    %165 = vst [vmem:[#allocation2 + $0x70] sm:$0xff] %v147
    %166 = vst [vmem:[#allocation2 + $0x78] sm:$0xff] %v149
    // Predicated region
    $region10: #{tpu_custom_call.1} parent=1 // pred_check
      _
    $region11: #{tpu_custom_call.1} parent=1 // pred_check_branch
      %168 = sbr.rel (0) target = $region13
    $region12: #{tpu_custom_call.1} parent=1 // pred_region
      %170 = vsyncadd [#allocation3], 0
      %s171 = sshll.u32 [#allocation2], 4
      %s172 = int_to_ptr.vmem [resolvable:$true] %s171
      %s173 = sshll.u32 %s2, 4
      %s174 = int_to_ptr.hbm [resolvable:$true] %s173
      %179 = dma.vmem_to_hbm [thread:$0]  %s172, 2048, %s174, [#allocation3], 128, 128, 8
    $region13: #{tpu_custom_call.1} parent=1 // pred_fallthru
      _
    // Predicated region
    $region14: #{tpu_custom_call.1} parent=1 // pred_check
      _
    $region15: #{tpu_custom_call.1} parent=1 // pred_check_branch
      %181 = sbr.rel (0) target = $region17
    $region16: #{tpu_custom_call.1} parent=1 // pred_region
      %183 = dma.done [#allocation3], 2048
    $region17: #{tpu_custom_call.1} parent=1 // pred_fallthru
      _
    %184 = vsyncpa [#allocation3], 1

</llo_original>
